<compile_context>
chip_gen: v5e
topology: v5e:2x2
jax: 0.10.0
libtpu: 0.0.40
codegen_flags: <defaults>
</compile_context>

<pallas_src>
import functools

import jax
import jax.numpy as jnp
from jax.experimental import pallas as pl
from jax.experimental.pallas import tpu as pltpu

_LANE = 128
_MAX_TB = 512
# 2 inputs + 1 output, double-buffered => 6 live tiles.  Keep them well under
# the v7x scoped-VMEM default (32 MiB) so the tiling is portable.
_VMEM_BUDGET_BYTES = 24 * 1024 * 1024


def _sublane_quantum(dtype) -> int:
    """Sublane packing quantum: f32 -> 8, bf16 -> 16, int8/fp8 -> 32."""
    return max(8, 32 // jnp.dtype(dtype).itemsize)


def _pick_tf(f: int) -> int:
    """Largest lane-aligned column tile that evenly divides f."""
    for c in (4096, 2048, 1024, 512, 256, 128):
        if f % c == 0:
            return c
    return _LANE  # unreachable: caller guarantees f % 128 == 0


def _pick_tb(b: int, tf: int, dtype) -> int:
    """Batch tile: dtype-aware sublane multiple, capped by the VMEM budget."""
    itemsize = jnp.dtype(dtype).itemsize
    sub_q = _sublane_quantum(dtype)
    tb_budget = _VMEM_BUDGET_BYTES // (6 * tf * itemsize)
    tb_budget = max(sub_q, (tb_budget // sub_q) * sub_q)
    tb_cap = min(_MAX_TB, tb_budget)
    if b <= sub_q:
        return b  # full-extent sublane block (legal for any b)
    return min(tb_cap, (b // sub_q) * sub_q)


def _concat_kernel(x_ref, add_ref, o_ref, *, nf):
    """Write one (tb, tf) column tile of the concatenated feature vector.

    Grid axis 0 tiles the batch, axis 1 tiles the output columns.  The first
    `nf` column tiles are lane-dense copies of the flattened observation; the
    remaining tile(s) carry the additional features (partial store when the
    extras are narrower than the tile; the out-of-bounds tail of the final
    edge block is discarded by Pallas on writeback).
    """
    j = pl.program_id(1)

    @pl.when(j < nf)
    def _():
        o_ref[...] = x_ref[...]

    @pl.when(j >= nf)
    def _():
        ta = add_ref.shape[-1]
        o_ref[:, :ta] = add_ref[...]


def nn_forward(x, additional_features=None, additional_features_size=0):
    """Forward of the (abstract) NN base: flatten NCHW x, append extra features.

    # TODO(synk): NN.forward() is abstract (raises NotImplementedError) in the
    # reference module; no network body is defined, so only the feature
    # assembly path (flatten + concat) is implemented here.
    """
    b = x.shape[0]
    x_flat = x.reshape(b, -1)
    f = x_flat.shape[1]

    # No extra features: pure reshape, zero data movement -- no kernel at all.
    if additional_features_size == 0 or additional_features is None:
        return x_flat

    add = additional_features
    a = add.shape[1]
    assert a == additional_features_size, "additional_features width mismatch"

    # Promote to a common dtype instead of silently downcasting the extras.
    out_dtype = jnp.promote_types(x_flat.dtype, add.dtype)
    x_flat = x_flat.astype(out_dtype)
    add = add.astype(out_dtype)

    if f == 0:  # degenerate empty observation
        return add

    if f % _LANE != 0:
        # A concat starting mid-lane-group would force masked partial stores
        # across the whole extras slab; let XLA fuse it into the consumer.
        # TODO(synk): fuse into the subclass head's first matmul (split GEMM).
        return jnp.concatenate([x_flat, add], axis=-1)

    # ---- tiling (VMEM-budgeted) --------------------------------------------
    tf = _pick_tf(f)                 # lane tile, multiple of 128, divides f
    tb = _pick_tb(b, tf, out_dtype)  # dtype-aware sublane tile
    nf = f // tf                     # observation column tiles

    if a <= tf:
        # Common DQN case: few extras.  Feed them as one full-extent column
        # block (no padding in HBM); the kernel does a single partial store
        # into the final output tile, whose OOB tail is masked on writeback.
        na = 1
        add_in = add
        add_spec = pl.BlockSpec((tb, a), lambda i, j: (i, 0))
    else:
        # Wide extras: tile them like the observation; pad only the extras
        # (small relative to the observation) so every read is in-bounds.
        na = pl.cdiv(a, tf)
        a_pad = na * tf
        add_in = jnp.pad(add, ((0, 0), (0, a_pad - a))) if a_pad != a else add
        add_spec = pl.BlockSpec((tb, tf), lambda i, j: (i, jnp.maximum(j - nf, 0)))

    grid = (pl.cdiv(b, tb), nf + na)

    out = pl.pallas_call(
        functools.partial(_concat_kernel, nf=nf),
        # Exact output shape: no post-kernel trim slice (no extra HBM pass).
        out_shape=jax.ShapeDtypeStruct((b, f + a), out_dtype),
        grid=grid,
        in_specs=[
            # Clamp the column index so every step addresses a valid block; the
            # tile fetched on the "other" branch keeps the same block index as
            # the previous step, so the pipeline skips re-issuing its DMA.
            pl.BlockSpec((tb, tf), lambda i, j: (i, jnp.minimum(j, nf - 1))),
            add_spec,
        ],
        out_specs=pl.BlockSpec((tb, tf), lambda i, j: (i, j)),
        compiler_params=pltpu.CompilerParams(
            dimension_semantics=("parallel", "parallel")),
    )(x_flat, add_in)
    return out


if __name__ == "__main__":
    key = jax.random.PRNGKey(0)
    kx, ka, kx2, ka2 = jax.random.split(key, 4)

    # Small shapes consistent with a DQN observation: NCHW (B=2, C=4, H=16, W=16)
    B, C, H, W = 2, 4, 16, 16
    ADD = 8  # additional_features_size

    x = jax.random.normal(kx, (B, C, H, W), dtype=jnp.float32)
    additional_features = jax.random.normal(ka, (B, ADD), dtype=jnp.float32)

    out = nn_forward(x, additional_features, additional_features_size=ADD)
    out = jax.block_until_ready(out)

    ref = jnp.concatenate([x.reshape(B, -1), additional_features], axis=-1)
    assert out.shape == (B, C * H * W + ADD)
    assert jnp.allclose(out, ref), "mismatch vs reference"

    # Wide-extras path (a > tf): exercises tiled extras + masked final tile.
    B2, C2, H2, W2, ADD2 = 8, 2, 8, 8, 200
    x2 = jax.random.normal(kx2, (B2, C2, H2, W2), dtype=jnp.float32)
    add2 = jax.random.normal(ka2, (B2, ADD2), dtype=jnp.float32)
    out_w = jax.block_until_ready(
        nn_forward(x2, add2, additional_features_size=ADD2))
    ref_w = jnp.concatenate([x2.reshape(B2, -1), add2], axis=-1)
    assert out_w.shape == (B2, C2 * H2 * W2 + ADD2)
    assert jnp.allclose(out_w, ref_w), "mismatch vs reference (wide extras)"

    # No-extra-features path: pure reshape, no kernel launch at all.
    out2 = jax.block_until_ready(nn_forward(x))
    assert out2.shape == (B, C * H * W)
    assert jnp.allclose(out2, x.reshape(B, -1)), "mismatch vs reference (no extras)"

    print("KERNEL_OK")
</pallas_src>

<mosaic_0001>
module attributes {stable_mosaic.version = 11 : i64} {
  func.func @_concat_kernel(%arg0: i32, %arg1: i32, %arg2: memref<2x1024xf32, #tpu.memory_space<vmem>>, %arg3: memref<2x8xf32, #tpu.memory_space<vmem>>, %arg4: memref<2x1024xf32, #tpu.memory_space<vmem>>) attributes {dimension_semantics = [#tpu.dimension_semantics<parallel>, #tpu.dimension_semantics<parallel>], iteration_bounds = array<i64: 1, 2>, scalar_prefetch = 0 : i64, scratch_operands = 0 : i64, tpu.core_type = #tpu.core_type<tc>, window_params = [{transform_indices = @transform_0, window_bounds = array<i64: 2, 1024>}, {transform_indices = @transform_1, window_bounds = array<i64: 2, 8>}, {transform_indices = @transform_2, window_bounds = array<i64: 2, 1024>}]} {
    %c1_i32 = arith.constant 1 : i32
    %0 = arith.cmpi slt, %arg1, %c1_i32 : i32
    %1 = arith.extui %0 : i1 to i32
    %c0_i32 = arith.constant 0 : i32
    %2 = arith.cmpi ne, %1, %c0_i32 : i32
    scf.if %2 {
      %c0 = arith.constant 0 : index
      %c0_2 = arith.constant 0 : index
      %6 = vector.load %arg2[%c0, %c0_2] : memref<2x1024xf32, #tpu.memory_space<vmem>>, vector<2x1024xf32>
      %c0_3 = arith.constant 0 : index
      %c0_4 = arith.constant 0 : index
      %7 = vector.load %arg4[%c0_3, %c0_4] : memref<2x1024xf32, #tpu.memory_space<vmem>>, vector<2x1024xf32>
      tpu.vector_store %arg4[%c0_3, %c0_4], %6 {strides = array<i32>} : memref<2x1024xf32, #tpu.memory_space<vmem>>, vector<2x1024xf32>,
    } else {
    }
    %c1_i32_0 = arith.constant 1 : i32
    %3 = arith.cmpi sge, %arg1, %c1_i32_0 : i32
    %4 = arith.extui %3 : i1 to i32
    %c0_i32_1 = arith.constant 0 : i32
    %5 = arith.cmpi ne, %4, %c0_i32_1 : i32
    scf.if %5 {
      %c0 = arith.constant 0 : index
      %c0_2 = arith.constant 0 : index
      %6 = vector.load %arg3[%c0, %c0_2] : memref<2x8xf32, #tpu.memory_space<vmem>>, vector<2x8xf32>
      %c0_3 = arith.constant 0 : index
      %c0_4 = arith.constant 0 : index
      %7 = vector.load %arg4[%c0_3, %c0_4] : memref<2x1024xf32, #tpu.memory_space<vmem>>, vector<2x8xf32>
      tpu.vector_store %arg4[%c0_3, %c0_4], %6 {strides = array<i32>} : memref<2x1024xf32, #tpu.memory_space<vmem>>, vector<2x8xf32>,
    } else {
    }
    return
  }
  func.func @transform_0(%arg0: i32, %arg1: i32) -> (i32, i32) {
    %c0_i32 = arith.constant 0 : i32
    %0 = arith.minsi %arg1, %c0_i32 : i32
    %c0_i32_0 = arith.constant 0 : i32
    return %arg0, %0 : i32, i32
  }
  func.func @transform_1(%arg0: i32, %arg1: i32) -> (i32, i32) {
    %c0_i32 = arith.constant 0 : i32
    %c0_i32_0 = arith.constant 0 : i32
    return %arg0, %c0_i32 : i32, i32
  }
  func.func @transform_2(%arg0: i32, %arg1: i32) -> (i32, i32) {
    %c0_i32 = arith.constant 0 : i32
    return %arg0, %arg1 : i32, i32
  }
}

</mosaic_0001>

<llo_original>
// kernel: tpu_custom_call.1
$region0: #{tpu_custom_call.1}
  #allocation0 [shape = 'u32[]', space=smem, size = 0x4, offset = 0x4, fixed_abs, tag = 'smem constant byte address 0x4 - core index']
  #allocation1 [shape = 'u32[72,128]{1,0:T(1,128)}', space=vmem, size = 0x9000, scoped, tag = 'internal scratch']
  %s0 = inlined_call_operand.hbm [shape: f32[2,1024], index: 0, kind: input, shape index: {}]
  %s1 = inlined_call_operand.hbm [shape: f32[2,8], index: 1, kind: input, shape index: {}]
  %s2 = inlined_call_operand.hbm [shape: f32[2,1032], index: 2, kind: output, shape index: {}]
  %s3 = sld [smem:[#allocation0]]
  $region57: #{tpu_custom_call.1} parent=0
    _
  %s5 = ssub.s32 1, %s3
  %s6 = scalar_select 0, %s5, %s3
  $region1: #{tpu_custom_call.1} parent=0
    #allocation2 [shape = 'u8[16384]{0}', space=vmem, size = 0x4000, scoped, tag = 'input window, operand 0']
    #allocation3 [shape = 's32[2]{0}', space=sflag, size = 0x8, scoped, tag = 'scoped memory for tpu_custom_call.1']
    #allocation4 [shape = 's32[2]{0}', space=sflag, size = 0x8, scoped, tag = 'scoped memory for tpu_custom_call.1']
    #allocation5 [shape = 'u8[1024]{0}', space=vmem, size = 0x400, scoped, tag = 'input window, operand 1, single buffered']
    #allocation6 [shape = 's32[1]{0}', space=sflag, size = 0x4, scoped, tag = 'scoped memory for tpu_custom_call.1']
    #allocation7 [shape = 'u8[16384]{0}', space=vmem, size = 0x4000, scoped, tag = 'output window, operand 0']
    %7 = vsyncpa [#allocation3], 0
    %s8 = scalar_lea.sflag [#allocation3], 1
    %9 = vsyncpa %s8, 0
    %10 = vsyncpa [#allocation6], 0
    %11 = vsyncpa [#allocation4], 0
    %s12 = scalar_lea.sflag [#allocation4], 1
    %13 = vsyncpa %s12, 0
    loop: start=0, step=1, limit=4
    $region2: #{tpu_custom_call.1} parent=1 // loop_pre_header
      _
    $region3: #{tpu_custom_call.1} parent=1 // loop_header
      %s15 = sphi 0, %s19
      %p16 = scmp.ge.s32.totalorder %s15, 4
      %s22 = sphi 0, %s34
      %s23 = sphi 0, %s30
      %s24 = sphi 0, %s22
      %s25 = sphi 0, %s23
      %s26 = sphi 0, %s24
      %s27 = sphi 0, %s25
      %s43 = sphi 0, %s45
      %s46 = sphi 0, %s43
      %s47 = sphi 0, %s46
      %s63 = sphi 0, %s47
      %s69 = sphi 0, %s71
      %s72 = sphi 0, %s69
      %s73 = sphi 0, %s72
      %s89 = sphi 0, %s73
      %s97 = sphi 0, %s99
      %s100 = sphi 0, %s97
      %s101 = sphi 0, %s100
      %s117 = sphi 0, %s101
    $region4: #{tpu_custom_call.1} parent=1 // loop_header_branch
      %18 = sbr.rel (%p16) target = $region8
    $region5: #{tpu_custom_call.1} parent=1 // loop_body
      %s20 = ssub.s32 %s15, 1
      %s21 = ssub.s32 %s15, 2
      %s28 = sadd.s32 1, %s23
      %p29 = scmp.ge.s32.totalorder %s28, 2
      %s30 = scalar_select %p29, 0, %s28
      %s31 = sadd.s32 1, %s22
      %s32 = scalar_select %p29, %s31, %s22
      %p33 = scmp.ge.s32.totalorder %s32, 1
      %s34 = scalar_select %p33, 0, %s32
      %p35 = scmp.lt.s32.totalorder %s23, 0
      %s36 = scalar_select %p35, %s23, 0
      %p37 = scmp.lt.s32.totalorder %s30, 0
      %s38 = scalar_select %p37, %s30, 0
      %s39 = ssub.s32 %s22, %s34
      %s40 = ssub.s32 %s36, %s38
      %s41 = sor.u32 %s39, %s40
      %p42 = scmp.eq.s32.totalorder %s41, 0
      %s44 = sadd.s32 %s43, 1
      %s45 = scalar_select %p42, %s43, %s44
      %p48 = pneg %p42
      %p49 = scmp.eq.s32.totalorder %s15, 1
      %p50 = por %p48, %p49
      %p51 = scmp.ne.s32.totalorder %s43, %s46
      %p52 = scmp.eq.s32.totalorder %s15, 0
      %p53 = por %p51, %p52
      %p54 = scmp.ne.s32.totalorder %s43, %s46
      %p55 = scmp.eq.s32.totalorder %s20, 1
      %p56 = por %p54, %p55
      %p57 = scmp.ne.s32.totalorder %s46, %s47
      %p58 = scmp.eq.s32.totalorder %s20, 0
      %p59 = por %p57, %p58
      %p60 = scmp.ne.s32.totalorder %s46, %s47
      %p61 = scmp.eq.s32.totalorder %s21, 1
      %p62 = por %p60, %p61
      %p64 = scmp.ne.s32.totalorder %s47, %s63
      %p65 = scmp.eq.s32.totalorder %s21, 0
      %p66 = por %p64, %p65
      %s67 = ssub.s32 %s22, %s34
      %p68 = scmp.eq.s32.totalorder %s67, 0
      %s70 = sadd.s32 %s69, 1
      %s71 = scalar_select %p68, %s69, %s70
      %p74 = pneg %p68
      %p75 = scmp.eq.s32.totalorder %s15, 1
      %p76 = por %p74, %p75
      %p77 = scmp.ne.s32.totalorder %s69, %s72
      %p78 = scmp.eq.s32.totalorder %s15, 0
      %p79 = por %p77, %p78
      %p80 = scmp.ne.s32.totalorder %s69, %s72
      %p81 = scmp.eq.s32.totalorder %s20, 1
      %p82 = por %p80, %p81
      %p83 = scmp.ne.s32.totalorder %s72, %s73
      %p84 = scmp.eq.s32.totalorder %s20, 0
      %p85 = por %p83, %p84
      %p86 = scmp.ne.s32.totalorder %s72, %s73
      %p87 = scmp.eq.s32.totalorder %s21, 1
      %p88 = por %p86, %p87
      %p90 = scmp.ne.s32.totalorder %s73, %s89
      %p91 = scmp.eq.s32.totalorder %s21, 0
      %p92 = por %p90, %p91
      %s93 = ssub.s32 %s22, %s34
      %s94 = ssub.s32 %s23, %s30
      %s95 = sor.u32 %s93, %s94
      %p96 = scmp.eq.s32.totalorder %s95, 0
      %s98 = sadd.s32 %s97, 1
      %s99 = scalar_select %p96, %s97, %s98
      %p102 = pneg %p96
      %p103 = scmp.eq.s32.totalorder %s15, 1
      %p104 = por %p102, %p103
      %p105 = scmp.ne.s32.totalorder %s97, %s100
      %p106 = scmp.eq.s32.totalorder %s15, 0
      %p107 = por %p105, %p106
      %p108 = scmp.ne.s32.totalorder %s97, %s100
      %p109 = scmp.eq.s32.totalorder %s20, 1
      %p110 = por %p108, %p109
      %p111 = scmp.ne.s32.totalorder %s100, %s101
      %p112 = scmp.eq.s32.totalorder %s20, 0
      %p113 = por %p111, %p112
      %p114 = scmp.ne.s32.totalorder %s100, %s101
      %p115 = scmp.eq.s32.totalorder %s21, 1
      %p116 = por %p114, %p115
      %p118 = scmp.ne.s32.totalorder %s101, %s117
      %p119 = scmp.eq.s32.totalorder %s21, 0
      %p120 = por %p118, %p119
      %p121 = scmp.le.s32.totalorder 1, %s15
      %p122 = scmp.lt.s32.totalorder %s15, 3
      %p123 = pnand %p121, %p122
      %p124 = pneg %p123
      // Predicated region
      $region9: #{tpu_custom_call.1} parent=5 // pred_check
        _
      $region10: #{tpu_custom_call.1} parent=5 // pred_check_branch
        %126 = sbr.rel (%p123) target = $region12
      $region11: #{tpu_custom_call.1} parent=5 // pred_region
        %s127 = ssub.s32 %s15, 1
        // Predicated region
        $region13: #{tpu_custom_call.1} parent=11 // pred_check
          %p128 = pneg %p85
        $region14: #{tpu_custom_call.1} parent=11 // pred_check_branch
          %130 = sbr.rel (%p128) target = $region16
        $region15: #{tpu_custom_call.1} parent=11 // pred_region
          %132 = vsyncadd [#allocation6], 0
          %s133 = smul.addr %s24, 2
          %s134 = scalar_lea.hbm %s1, %s133
          %s136 = sshll.u32 %s134, 4
          %s137 = int_to_ptr.hbm [resolvable:$true] %s136
          %s138 = sshll.u32 [#allocation5], 4
          %s139 = int_to_ptr.vmem [resolvable:$true] %s138
          %141 = dma.hbm_to_vmem [thread:$0]  %s137, 32, %s139, [#allocation6]
        $region16: #{tpu_custom_call.1} parent=11 // pred_fallthru
          _
      $region12: #{tpu_custom_call.1} parent=5 // pred_fallthru
        _
      %p142 = scmp.lt.s32.totalorder %s15, 2
      // Predicated region
      $region17: #{tpu_custom_call.1} parent=5 // pred_check
        %p143 = pneg %p142
      $region18: #{tpu_custom_call.1} parent=5 // pred_check_branch
        %145 = sbr.rel (%p143) target = $region20
      $region19: #{tpu_custom_call.1} parent=5 // pred_region
        // Predicated region
        $region21: #{tpu_custom_call.1} parent=19 // pred_check
          %p146 = pneg %p53
        $region22: #{tpu_custom_call.1} parent=19 // pred_check_branch
          %148 = sbr.rel (%p146) target = $region24
        $region23: #{tpu_custom_call.1} parent=19 // pred_region
          %s149 = sand.u32 %s43, 1
          %s150 = scalar_lea.sflag [#allocation3], %s149
          %s151 = sand.u32 %s43, 1
          %s152 = smul.addr %s151, 16
          %s153 = scalar_lea.vmem [#allocation2], %s152
          %p154 = scmp.lt.s32.totalorder %s23, 0
          %s155 = scalar_select %p154, %s23, 0
          %s156 = smul.u32 8, %s155
          %158 = vsyncadd %s150, 0
          %s159 = smul.addr %s22, 8
          %s160 = sadd.s32 %s156, %s159
          %s161 = smul.addr %s160, 2
          %s162 = scalar_lea.hbm %s0, %s161
          %s164 = sshll.u32 %s162, 4
          %s165 = int_to_ptr.hbm [resolvable:$true] %s164
          %s166 = sshll.u32 %s153, 4
          %s167 = int_to_ptr.vmem [resolvable:$true] %s166
          %169 = dma.hbm_to_vmem [thread:$0]  %s165, 256, %s167, %s150
        $region24: #{tpu_custom_call.1} parent=19 // pred_fallthru
          _
      $region20: #{tpu_custom_call.1} parent=5 // pred_fallthru
        _
      %p170 = scmp.le.s32.totalorder 1, %s15
      %p171 = scmp.lt.s32.totalorder %s15, 3
      %p172 = pnand %p170, %p171
      %p173 = pneg %p172
      // Predicated region
      $region25: #{tpu_custom_call.1} parent=5 // pred_check
        _
      $region26: #{tpu_custom_call.1} parent=5 // pred_check_branch
        %175 = sbr.rel (%p172) target = $region28
      $region27: #{tpu_custom_call.1} parent=5 // pred_region
        %s176 = ssub.s32 %s15, 1
        %s177 = sand.u32 %s46, 1
        %s178 = scalar_lea.sflag [#allocation3], %s177
        %s179 = sand.u32 %s46, 1
        %s180 = smul.addr %s179, 16
        %s181 = scalar_lea.vmem [#allocation2], %s180
        // Predicated region
        $region29: #{tpu_custom_call.1} parent=27 // pred_check
          %p182 = pneg %p59
        $region30: #{tpu_custom_call.1} parent=27 // pred_check_branch
          %184 = sbr.rel (%p182) target = $region32
        $region31: #{tpu_custom_call.1} parent=27 // pred_region
          %186 = dma.done %s178, 256
        $region32: #{tpu_custom_call.1} parent=27 // pred_fallthru
          _
        // Predicated region
        $region33: #{tpu_custom_call.1} parent=27 // pred_check
          %p187 = pneg %p85
        $region34: #{tpu_custom_call.1} parent=27 // pred_check_branch
          %189 = sbr.rel (%p187) target = $region36
        $region35: #{tpu_custom_call.1} parent=27 // pred_region
          %191 = dma.done [#allocation6], 32
        $region36: #{tpu_custom_call.1} parent=27 // pred_fallthru
          _
        %s192 = sand.u32 %s46, 1
        %s193 = scalar_lea.sflag [#allocation3], %s192
        %s194 = sand.u32 %s46, 1
        %s195 = smul.addr %s194, 16
        %s196 = scalar_lea.vmem [#allocation2], %s195
        %p197 = pneg %p59
        %p198 = pneg %p56
        %p199 = pneg %p85
        %p200 = pneg %p82
        %p201 = pneg %p113
        %p202 = pneg %p110
        %s203 = sand.u32 %s100, 1
        %s204 = scalar_lea.sflag [#allocation4], %s203
        %s205 = sand.u32 %s100, 1
        %s206 = smul.addr %s205, 16
        %s207 = scalar_lea.vmem [#allocation7], %s206
        %p208 = scmp.lt.s32.totalorder %s25, 0
        %s209 = scalar_select %p208, %s25, 0
        %s210 = smul.u32 8, %s209
        %s211 = smul.u32 8, %s25
        %s212 = ssub.s32 9, %s211
        %p213 = scmp.lt.s32.totalorder %s212, 8
        %s214 = scalar_select %p213, %s212, 8
        %s215 = smul.u32 2, %s214
        %p216 = scmp.lt.s32.totalorder %s25, 1
        // Predicated region
        $region37: #{tpu_custom_call.1} parent=27 // pred_check
          %p217 = pneg %p216
        $region38: #{tpu_custom_call.1} parent=27 // pred_check_branch
          %219 = sbr.rel (%p217) target = $region40
        $region39: #{tpu_custom_call.1} parent=27 // pred_region
          %v220 = vld [vmem:[%s181] sm:$0xff]
          %v221 = vld [vmem:[%s181 + $0x8] sm:$0xff]
          %222 = vst [vmem:[%s207] sm:$0xff] %v220
          %223 = vst [vmem:[%s207 + $0x8] sm:$0xff] %v221
        $region40: #{tpu_custom_call.1} parent=27 // pred_fallthru
          _
        %p224 = scmp.ge.s32.totalorder %s25, 1
        // Predicated region
        $region41: #{tpu_custom_call.1} parent=27 // pred_check
          %p225 = pneg %p224
        $region42: #{tpu_custom_call.1} parent=27 // pred_check_branch
          %227 = sbr.rel (%p225) target = $region44
        $region43: #{tpu_custom_call.1} parent=27 // pred_region
          %v228 = vld [vmem:[#allocation5] sm:$0x3]
          %vm229 = vcmask 58368
          %230 = vst.msk [vmem:[%s207] sm:$0x3] %vm229, %v228
        $region44: #{tpu_custom_call.1} parent=27 // pred_fallthru
          _
        %s231 = sand.u32 %s100, 1
        %s232 = scalar_lea.sflag [#allocation4], %s231
        %s233 = sand.u32 %s100, 1
        %s234 = smul.addr %s233, 16
        %s235 = scalar_lea.vmem [#allocation7], %s234
        // Predicated region
        $region45: #{tpu_custom_call.1} parent=27 // pred_check
          %p236 = pneg %p110
        $region46: #{tpu_custom_call.1} parent=27 // pred_check_branch
          %238 = sbr.rel (%p236) target = $region48
        $region47: #{tpu_custom_call.1} parent=27 // pred_region
          %s239 = smul.u32 8, %s25
          %s240 = ssub.s32 9, %s239
          %p241 = scmp.lt.s32.totalorder %s240, 8
          %s242 = scalar_select %p241, %s240, 8
          %s243 = smul.u32 2, %s242
          %s244 = ssub.s32 16, %s243
          %s245 = sshll.u32 %s244, 4
          %246 = vsyncadd %s232, %s245
          %p247 = scmp.ne.s32.totalorder 0, %s243
          %s248 = smul.addr %s24, 9
          %s249 = sadd.s32 %s239, %s248
          %s250 = smul.addr %s249, 2
          %s251 = scalar_lea.hbm %s2, %s250
          %s252 = smul.u32 %s242, 2
          %s253 = sshll.u32 %s252, 4
          %s254 = sshll.u32 %s235, 4
          %s255 = int_to_ptr.vmem [resolvable:$true] %s254
          %s256 = sshll.u32 %s251, 4
          %s257 = int_to_ptr.hbm [resolvable:$true] %s256
          %259 = dma.vmem_to_hbm [thread:$0]  (%p247), %s255, %s253, %s257, %s232
        $region48: #{tpu_custom_call.1} parent=27 // pred_fallthru
          _
      $region28: #{tpu_custom_call.1} parent=5 // pred_fallthru
        _
      %p260 = scmp.le.s32.totalorder 2, %s15
      // Predicated region
      $region49: #{tpu_custom_call.1} parent=5 // pred_check
        %p261 = pneg %p260
      $region50: #{tpu_custom_call.1} parent=5 // pred_check_branch
        %263 = sbr.rel (%p261) target = $region52
      $region51: #{tpu_custom_call.1} parent=5 // pred_region
        %s264 = ssub.s32 %s15, 2
        // Predicated region
        $region53: #{tpu_custom_call.1} parent=51 // pred_check
          %p265 = pneg %p116
        $region54: #{tpu_custom_call.1} parent=51 // pred_check_branch
          %267 = sbr.rel (%p265) target = $region56
        $region55: #{tpu_custom_call.1} parent=51 // pred_region
          %s268 = sand.u32 %s101, 1
          %s269 = scalar_lea.sflag [#allocation4], %s268
          %s270 = sand.u32 %s101, 1
          %s271 = smul.addr %s270, 16
          %s272 = scalar_lea.vmem [#allocation7], %s271
          %274 = dma.done %s269, 256
        $region56: #{tpu_custom_call.1} parent=51 // pred_fallthru
          _
      $region52: #{tpu_custom_call.1} parent=5 // pred_fallthru
        _
    $region6: #{tpu_custom_call.1} parent=1 // loop_footer
      %s19 = sadd.s32 1, %s15
    $region7: #{tpu_custom_call.1} parent=1 // loop_footer_branch
      %14 = sbr.rel target = $region3
    $region8: #{tpu_custom_call.1} parent=1 // loop_exit
      _
    %275 = vsyncpa [#allocation3], 1
    %s276 = scalar_lea.sflag [#allocation3], 1
    %277 = vsyncpa %s276, 1
    %278 = vsyncpa [#allocation6], 1
    %279 = vsyncpa [#allocation4], 1
    %s280 = scalar_lea.sflag [#allocation4], 1
    %281 = vsyncpa %s280, 1

</llo_original>
